<compile_context>
chip_gen: v7x
topology: tpu7x:2x2x1
jax: 0.10.0
libtpu: 0.0.40
codegen_flags: <defaults>
</compile_context>

<pallas_src>
import jax
import jax.numpy as jnp
from jax.experimental import pallas as pl
from jax.experimental.pallas import tpu as pltpu


def cats_kernel(x_ref, w1_ref, b1_ref, w2_ref, b2_ref, w3_ref, b3_ref, o_ref):
    """One batch tile of the CATS forward pass, feature-major (batch on lanes).

    x_ref:  (E, 3*tm)  lanes laid out per tile as [ q | p1 | p2 ]  (compute dtype)
    w1_ref: (5E, E)    LL1 weight, PyTorch (out, in) layout        (compute dtype)
    b1_ref: (5E, 1)    LL1 bias column (f32)
    w2_ref: (E, 5E)    LL2 weight                                   (compute dtype)
    b2_ref: (E, 1)     LL2 bias column (f32)
    w3_ref: (40, E)    LL3 weight split into 5 chunks of E, each replicated
                       over 8 sublanes                              (compute dtype)
    b3_ref: (1,)       LL3 bias scalar (SMEM, f32)
    o_ref:  (1, tm)    pairwise CATS scores (f32)
    """
    tm = o_ref.shape[1]

    x_all = x_ref[...]                                              # (E, 3*tm)
    cdt = x_all.dtype                                               # compute dtype

    # Shared MLP on q / p1 / p2 in one wide MXU pass.  Accumulation is f32
    # (preferred_element_type); elementwise bias/ReLU stay f32 (v5e-safe).
    h = jnp.dot(w1_ref[...], x_all,
                preferred_element_type=jnp.float32) + b1_ref[...]   # (5E, 3tm)
    h = jnp.maximum(h, 0.0)
    z = jnp.dot(w2_ref[...], h.astype(cdt),
                preferred_element_type=jnp.float32) + b2_ref[...]   # (E, 3tm)
    z = jnp.maximum(z, 0.0)

    zq = z[:, :tm]            # lane offsets are multiples of 128 -> cheap slices
    zp1 = z[:, tm:2 * tm]
    zp2 = z[:, 2 * tm:]

    # NOTE: the PyTorch module also computes z1/z2/zdiff (abs diffs of the RAW
    # embeddings) but they never feed the returned score -> intentionally skipped.

    # LL3 as five accumulated K=E matmuls -- no materialized (5E, tm) concat.
    w3 = w3_ref[...]                                                # (40, E)
    s = jnp.dot(w3[0:8], zp1.astype(cdt), preferred_element_type=jnp.float32)
    s += jnp.dot(w3[8:16], zp2.astype(cdt), preferred_element_type=jnp.float32)
    s += jnp.dot(w3[16:24], jnp.abs(zp1 - zp2).astype(cdt),
                 preferred_element_type=jnp.float32)
    s += jnp.dot(w3[24:32], jnp.abs(zp1 - zq).astype(cdt),
                 preferred_element_type=jnp.float32)
    s += jnp.dot(w3[32:40], jnp.abs(zp2 - zq).astype(cdt),
                 preferred_element_type=jnp.float32)                # (8, tm)

    # Only row 0 is the real score; the store stays lane-dense (last dim = tm).
    o_ref[...] = jnp.maximum(s[:1, :] + b3_ref[0], 0.0).astype(o_ref.dtype)


def cats_forward(x, params, *, tm_max=2048, use_bf16=False):
    """x: (N, 3*E) float32.  Returns (N,) float32 pairwise CATS scores."""
    w1, b1, w2, b2, w3, b3 = params   # PyTorch (out, in) weight layout.
    N, three_e = x.shape
    E = w1.shape[1]
    assert three_e == 3 * E
    assert tm_max % 128 == 0

    cdt = jnp.bfloat16 if use_bf16 else jnp.float32

    # Adaptive batch tile: big enough to amortize per-step overhead, but never
    # larger than the 128-rounded batch (don't pad N=16 up to thousands).
    tm = min(tm_max, pl.cdiv(N, 128) * 128)
    n_pad = pl.cdiv(N, tm) * tm
    if n_pad != N:
        x = jnp.pad(x, ((0, n_pad - N), (0, 0)))
    n_tiles = n_pad // tm

    # Feature-major, per-tile lane-interleaved layout [ q | p1 | p2 ]:
    # one slab, one BlockSpec, no in-kernel concat (pure layout plumbing folded
    # into the transpose we already pay for).
    x_t = (x.reshape(n_tiles, tm, 3, E)
            .transpose(3, 0, 2, 1)          # (E, n_tiles, 3, tm)
            .reshape(E, 3 * n_pad)
            .astype(cdt))

    # LL3 weight (1, 5E) -> 5 chunks of E, each replicated across 8 sublanes,
    # so the kernel reads sublane-aligned (8, E) slices (offsets multiple of 8).
    w3_stack = jnp.broadcast_to(w3.reshape(5, 1, E), (5, 8, E)).reshape(40, E)

    w1c = w1.astype(cdt)
    w2c = w2.astype(cdt)
    w3c = w3_stack.astype(cdt)

    csize = jnp.dtype(cdt).itemsize
    # Rough per-step VMEM budget (double-buffered in/out + f32 intermediates),
    # 2x headroom, capped at 64 MiB so it also fits v7x's physical VMEM.
    vmem_est = (2 * E * 3 * tm * csize            # input slab (double-buffered)
                + 2 * tm * 4                      # output (double-buffered)
                + 5 * E * 3 * tm * (4 + csize)    # h (f32) + cast copy
                + E * 3 * tm * 4                  # z (f32)
                + 5 * E * tm * (4 + csize)        # abs-diff slabs + casts
                + 2 * (5 * E * E + 5 * E * E + 40 * E) * csize   # weights (dbuf)
                + 2 * 6 * E * 4)                  # biases
    vmem_limit = int(min(max(2 * vmem_est, 4 << 20), 64 << 20))

    flops = 2 * (5 * E * E + E * 5 * E) * 3 * n_pad + 2 * 8 * 5 * E * n_pad
    bytes_accessed = (x_t.size * csize
                      + (w1c.size + w2c.size + w3c.size) * csize
                      + (b1.size + b2.size + b3.size) * 4
                      + n_pad * 4)

    const = lambda shape: pl.BlockSpec(shape, lambda i: (0, 0))
    # TODO(synk): add pipeline_mode=pl.Buffered(1) to the constant weight specs
    # once single-buffered pipeline_mode is verified on all target jaxlibs
    # (saves one duplicate weight buffer; negligible at E=32).

    out = pl.pallas_call(
        cats_kernel,
        out_shape=jax.ShapeDtypeStruct((1, n_pad), jnp.float32),
        grid_spec=pltpu.PrefetchScalarGridSpec(
            num_scalar_prefetch=0,
            grid=(n_tiles,),
            in_specs=[
                pl.BlockSpec((E, 3 * tm), lambda i: (0, i)),  # [q|p1|p2] slab
                const((5 * E, E)),                            # W1 (out, in)
                const((5 * E, 1)),                            # b1 column (f32)
                const((E, 5 * E)),                            # W2
                const((E, 1)),                                # b2 column (f32)
                const((40, E)),                               # W3 stacked
                pl.BlockSpec(memory_space=pltpu.MemorySpace.SMEM),  # b3 scalar
            ],
            out_specs=pl.BlockSpec((1, tm), lambda i: (0, i)),
        ),
        compiler_params=pltpu.CompilerParams(
            dimension_semantics=("parallel",),
            vmem_limit_bytes=vmem_limit),
        cost_estimate=pl.CostEstimate(
            flops=int(flops), transcendentals=0,
            bytes_accessed=int(bytes_accessed)),
    )(x_t, w1c, b1, w2c, b2, w3c, b3)

    # Padded rows (N..n_pad) hold garbage (bias+ReLU) scores; always slice.
    return out[0, :N]


def init_params(key, emb_size):
    """Deterministic init matching nn.Linear's U(-1/sqrt(fan_in), +1/sqrt(fan_in)).

    Weights stay in PyTorch (out_features, in_features) layout; b1/b2 are
    (out_features, 1) columns, b3 is a (1,) scalar array.
    """
    E = emb_size
    ks = jax.random.split(key, 6)

    def lin(kw, kb, fan_in, fan_out):
        bound = 1.0 / jnp.sqrt(fan_in)
        w = jax.random.uniform(kw, (fan_out, fan_in), jnp.float32, -bound, bound)
        b = jax.random.uniform(kb, (fan_out,), jnp.float32, -bound, bound)
        return w, b

    w1, b1 = lin(ks[0], ks[1], E, 5 * E)        # LL1: (5E, E)
    w2, b2 = lin(ks[2], ks[3], 5 * E, E)        # LL2: (E, 5E)
    w3, b3 = lin(ks[4], ks[5], 5 * E, 1)        # LL3: (1, 5E)
    return w1, b1.reshape(-1, 1), w2, b2.reshape(-1, 1), w3, b3


def cats_reference(x, params):
    """Pure-JAX reference of CATS_arxiv.forward (for correctness check)."""
    w1, b1, w2, b2, w3, b3 = params
    E = w1.shape[1]
    hi = jax.lax.Precision.HIGHEST
    xq, xp1, xp2 = x[:, :E], x[:, E:2 * E], x[:, 2 * E:]

    def mlp(v):
        h = jnp.maximum(jnp.dot(v, w1.T, precision=hi) + b1[:, 0], 0.0)
        return jnp.maximum(jnp.dot(h, w2.T, precision=hi) + b2[:, 0], 0.0)

    zp1, zp2, zq = mlp(xp1), mlp(xp2), mlp(xq)
    z = jnp.concatenate(
        [zp1, zp2, jnp.abs(zp1 - zp2), jnp.abs(zp1 - zq), jnp.abs(zp2 - zq)],
        axis=1)
    return jnp.maximum(jnp.dot(z, w3.T, precision=hi) + b3, 0.0).reshape(-1)


if __name__ == "__main__":
    emb_size = 32
    n_pairs = 16          # "mC2" rows

    key = jax.random.PRNGKey(0)
    k_x, k_p = jax.random.split(key)

    x = jax.random.normal(k_x, (n_pairs, 3 * emb_size), dtype=jnp.float32)
    params = init_params(k_p, emb_size)

    ref = cats_reference(x, params)

    # f32 path: tight tolerance.
    out_f32 = jax.block_until_ready(cats_forward(x, params, use_bf16=False))
    assert out_f32.shape == (n_pairs,)
    assert jnp.allclose(out_f32, ref, atol=1e-4, rtol=1e-4), (out_f32, ref)

    # bf16 matmul-operand path (MXU-native on v5e/v6e/v7x): looser tolerance.
    out_bf16 = jax.block_until_ready(cats_forward(x, params, use_bf16=True))
    assert out_bf16.shape == (n_pairs,)
    assert jnp.allclose(out_bf16, ref, atol=7.5e-2, rtol=7.5e-2), (out_bf16, ref)

    print("KERNEL_OK")
</pallas_src>

<mosaic_0001>
module attributes {stable_mosaic.version = 11 : i64} {
  func.func @cats_kernel(%arg0: i32, %arg1: memref<32x384xf32, #tpu.memory_space<vmem>>, %arg2: memref<160x32xf32, #tpu.memory_space<vmem>>, %arg3: memref<160x1xf32, #tpu.memory_space<vmem>>, %arg4: memref<32x160xf32, #tpu.memory_space<vmem>>, %arg5: memref<32x1xf32, #tpu.memory_space<vmem>>, %arg6: memref<40x32xf32, #tpu.memory_space<vmem>>, %arg7: memref<1xf32, #tpu.memory_space<smem>>, %arg8: memref<1x128xf32, #tpu.memory_space<vmem>>) attributes {dimension_semantics = [#tpu.dimension_semantics<parallel>], iteration_bounds = array<i64: 1>, scalar_prefetch = 0 : i64, scratch_operands = 0 : i64, tpu.core_type = #tpu.core_type<tc>, window_params = [{transform_indices = @transform_0, window_bounds = array<i64: 32, 384>}, {pipeline_mode = #tpu.pipeline_mode<synchronous>, transform_indices = @transform_1, window_bounds = array<i64: 160, 32>}, {pipeline_mode = #tpu.pipeline_mode<synchronous>, transform_indices = @transform_2, window_bounds = array<i64: 160, 1>}, {pipeline_mode = #tpu.pipeline_mode<synchronous>, transform_indices = @transform_3, window_bounds = array<i64: 32, 160>}, {pipeline_mode = #tpu.pipeline_mode<synchronous>, transform_indices = @transform_4, window_bounds = array<i64: 32, 1>}, {pipeline_mode = #tpu.pipeline_mode<synchronous>, transform_indices = @transform_5, window_bounds = array<i64: 40, 32>}, {transform_indices = @transform_6, window_bounds = array<i64: 1>}, {transform_indices = @transform_7, window_bounds = array<i64: 1, 128>}]} {
    %c0 = arith.constant 0 : index
    %c0_0 = arith.constant 0 : index
    %0 = vector.load %arg1[%c0, %c0_0] : memref<32x384xf32, #tpu.memory_space<vmem>>, vector<32x384xf32>
    %c0_1 = arith.constant 0 : index
    %c0_2 = arith.constant 0 : index
    %1 = vector.load %arg2[%c0_1, %c0_2] : memref<160x32xf32, #tpu.memory_space<vmem>>, vector<160x32xf32>
    %cst = arith.constant dense<0.000000e+00> : vector<160x384xf32>
    %2 = tpu.matmul %1, %0, %cst {dimension_numbers = #tpu.dot_dimension_numbers<[1], [0], [0], [1], [0, 0, 1, 1], [], []>} : vector<160x32xf32>, vector<32x384xf32>, vector<160x384xf32> -> vector<160x384xf32>
    %c0_3 = arith.constant 0 : index
    %c0_4 = arith.constant 0 : index
    %3 = vector.load %arg3[%c0_3, %c0_4] : memref<160x1xf32, #tpu.memory_space<vmem>>, vector<160x1xf32>
    %4 = vector.broadcast %3 : vector<160x1xf32> to vector<160x384xf32>
    %5 = arith.addf %2, %4 : vector<160x384xf32>
    %cst_5 = arith.constant 0.000000e+00 : f32
    %6 = vector.broadcast %cst_5 : f32 to vector<160x384xf32>
    %7 = arith.maximumf %5, %6 : vector<160x384xf32>
    %c0_6 = arith.constant 0 : index
    %c0_7 = arith.constant 0 : index
    %8 = vector.load %arg4[%c0_6, %c0_7] : memref<32x160xf32, #tpu.memory_space<vmem>>, vector<32x160xf32>
    %cst_8 = arith.constant dense<0.000000e+00> : vector<32x384xf32>
    %9 = tpu.matmul %8, %7, %cst_8 {dimension_numbers = #tpu.dot_dimension_numbers<[1], [0], [0], [1], [0, 0, 1, 1], [], []>} : vector<32x160xf32>, vector<160x384xf32>, vector<32x384xf32> -> vector<32x384xf32>
    %c0_9 = arith.constant 0 : index
    %c0_10 = arith.constant 0 : index
    %10 = vector.load %arg5[%c0_9, %c0_10] : memref<32x1xf32, #tpu.memory_space<vmem>>, vector<32x1xf32>
    %11 = vector.broadcast %10 : vector<32x1xf32> to vector<32x384xf32>
    %12 = arith.addf %9, %11 : vector<32x384xf32>
    %cst_11 = arith.constant 0.000000e+00 : f32
    %13 = vector.broadcast %cst_11 : f32 to vector<32x384xf32>
    %14 = arith.maximumf %12, %13 : vector<32x384xf32>
    %15 = vector.extract_strided_slice %14 {offsets = [0, 0], sizes = [32, 128], strides = [1, 1]} : vector<32x384xf32> to vector<32x128xf32>
    %16 = vector.extract_strided_slice %14 {offsets = [0, 128], sizes = [32, 128], strides = [1, 1]} : vector<32x384xf32> to vector<32x128xf32>
    %17 = vector.extract_strided_slice %14 {offsets = [0, 256], sizes = [32, 128], strides = [1, 1]} : vector<32x384xf32> to vector<32x128xf32>
    %c0_12 = arith.constant 0 : index
    %c0_13 = arith.constant 0 : index
    %18 = vector.load %arg6[%c0_12, %c0_13] : memref<40x32xf32, #tpu.memory_space<vmem>>, vector<40x32xf32>
    %19 = vector.extract_strided_slice %18 {offsets = [0, 0], sizes = [8, 32], strides = [1, 1]} : vector<40x32xf32> to vector<8x32xf32>
    %cst_14 = arith.constant dense<0.000000e+00> : vector<8x128xf32>
    %20 = tpu.matmul %19, %16, %cst_14 {dimension_numbers = #tpu.dot_dimension_numbers<[1], [0], [0], [1], [0, 0, 1, 1], [], []>} : vector<8x32xf32>, vector<32x128xf32>, vector<8x128xf32> -> vector<8x128xf32>
    %21 = vector.extract_strided_slice %18 {offsets = [8, 0], sizes = [8, 32], strides = [1, 1]} : vector<40x32xf32> to vector<8x32xf32>
    %cst_15 = arith.constant dense<0.000000e+00> : vector<8x128xf32>
    %22 = tpu.matmul %21, %17, %cst_15 {dimension_numbers = #tpu.dot_dimension_numbers<[1], [0], [0], [1], [0, 0, 1, 1], [], []>} : vector<8x32xf32>, vector<32x128xf32>, vector<8x128xf32> -> vector<8x128xf32>
    %23 = arith.addf %20, %22 : vector<8x128xf32>
    %24 = vector.extract_strided_slice %18 {offsets = [16, 0], sizes = [8, 32], strides = [1, 1]} : vector<40x32xf32> to vector<8x32xf32>
    %25 = arith.subf %16, %17 : vector<32x128xf32>
    %26 = math.absf %25 : vector<32x128xf32>
    %cst_16 = arith.constant dense<0.000000e+00> : vector<8x128xf32>
    %27 = tpu.matmul %24, %26, %cst_16 {dimension_numbers = #tpu.dot_dimension_numbers<[1], [0], [0], [1], [0, 0, 1, 1], [], []>} : vector<8x32xf32>, vector<32x128xf32>, vector<8x128xf32> -> vector<8x128xf32>
    %28 = arith.addf %23, %27 : vector<8x128xf32>
    %29 = vector.extract_strided_slice %18 {offsets = [24, 0], sizes = [8, 32], strides = [1, 1]} : vector<40x32xf32> to vector<8x32xf32>
    %30 = arith.subf %16, %15 : vector<32x128xf32>
    %31 = math.absf %30 : vector<32x128xf32>
    %cst_17 = arith.constant dense<0.000000e+00> : vector<8x128xf32>
    %32 = tpu.matmul %29, %31, %cst_17 {dimension_numbers = #tpu.dot_dimension_numbers<[1], [0], [0], [1], [0, 0, 1, 1], [], []>} : vector<8x32xf32>, vector<32x128xf32>, vector<8x128xf32> -> vector<8x128xf32>
    %33 = arith.addf %28, %32 : vector<8x128xf32>
    %34 = vector.extract_strided_slice %18 {offsets = [32, 0], sizes = [8, 32], strides = [1, 1]} : vector<40x32xf32> to vector<8x32xf32>
    %35 = arith.subf %17, %15 : vector<32x128xf32>
    %36 = math.absf %35 : vector<32x128xf32>
    %cst_18 = arith.constant dense<0.000000e+00> : vector<8x128xf32>
    %37 = tpu.matmul %34, %36, %cst_18 {dimension_numbers = #tpu.dot_dimension_numbers<[1], [0], [0], [1], [0, 0, 1, 1], [], []>} : vector<8x32xf32>, vector<32x128xf32>, vector<8x128xf32> -> vector<8x128xf32>
    %38 = arith.addf %33, %37 : vector<8x128xf32>
    %39 = vector.extract_strided_slice %38 {offsets = [0, 0], sizes = [1, 128], strides = [1, 1]} : vector<8x128xf32> to vector<1x128xf32>
    %c0_19 = arith.constant 0 : index
    %40 = memref.load %arg7[%c0_19] : memref<1xf32, #tpu.memory_space<smem>>
    %41 = vector.broadcast %40 : f32 to vector<1x128xf32>
    %42 = arith.addf %39, %41 : vector<1x128xf32>
    %cst_20 = arith.constant 0.000000e+00 : f32
    %43 = vector.broadcast %cst_20 : f32 to vector<1x128xf32>
    %44 = arith.maximumf %42, %43 : vector<1x128xf32>
    %c0_21 = arith.constant 0 : index
    %c0_22 = arith.constant 0 : index
    %45 = vector.load %arg8[%c0_21, %c0_22] : memref<1x128xf32, #tpu.memory_space<vmem>>, vector<1x128xf32>
    tpu.vector_store %arg8[%c0_21, %c0_22], %44 {strides = array<i32>} : memref<1x128xf32, #tpu.memory_space<vmem>>, vector<1x128xf32>,
    return
  }
  func.func @transform_0(%arg0: i32) -> (i32, i32) {
    %c0_i32 = arith.constant 0 : i32
    %c0_i32_0 = arith.constant 0 : i32
    return %c0_i32, %arg0 : i32, i32
  }
  func.func @transform_1(%arg0: i32) -> (i32, i32) {
    %c0_i32 = arith.constant 0 : i32
    %c0_i32_0 = arith.constant 0 : i32
    %c0_i32_1 = arith.constant 0 : i32
    return %c0_i32, %c0_i32_0 : i32, i32
  }
  func.func @transform_2(%arg0: i32) -> (i32, i32) {
    %c0_i32 = arith.constant 0 : i32
    %c0_i32_0 = arith.constant 0 : i32
    %c0_i32_1 = arith.constant 0 : i32
    return %c0_i32, %c0_i32_0 : i32, i32
  }
  func.func @transform_3(%arg0: i32) -> (i32, i32) {
    %c0_i32 = arith.constant 0 : i32
    %c0_i32_0 = arith.constant 0 : i32
    %c0_i32_1 = arith.constant 0 : i32
    return %c0_i32, %c0_i32_0 : i32, i32
  }
  func.func @transform_4(%arg0: i32) -> (i32, i32) {
    %c0_i32 = arith.constant 0 : i32
    %c0_i32_0 = arith.constant 0 : i32
    %c0_i32_1 = arith.constant 0 : i32
    return %c0_i32, %c0_i32_0 : i32, i32
  }
  func.func @transform_5(%arg0: i32) -> (i32, i32) {
    %c0_i32 = arith.constant 0 : i32
    %c0_i32_0 = arith.constant 0 : i32
    %c0_i32_1 = arith.constant 0 : i32
    return %c0_i32, %c0_i32_0 : i32, i32
  }
  func.func @transform_6(%arg0: i32) -> i32 {
    %c0_i32 = arith.constant 0 : i32
    %c0_i32_0 = arith.constant 0 : i32
    return %c0_i32 : i32
  }
  func.func @transform_7(%arg0: i32) -> (i32, i32) {
    %c0_i32 = arith.constant 0 : i32
    %c0_i32_0 = arith.constant 0 : i32
    return %c0_i32, %arg0 : i32, i32
  }
}

</mosaic_0001>

<llo_original>
// kernel: tpu_custom_call.1
$region0: #{tpu_custom_call.1}
  #allocation0 [shape = 'u32[]', space=smem, size = 0x4, offset = 0x4, fixed_abs, tag = 'smem constant byte address 0x4 - core index']
  #allocation1 [shape = 'u32[144,128]{1,0:T(1,128)}', space=vmem, size = 0x12000, scoped, tag = 'internal scratch']
  #allocation2 [shape = 'f32[1]{0:T(128)S(6)}', space=smem, size = 0x200, scoped, tag = 'scoped memory for tpu_custom_call.1']
  %s0 = inlined_call_operand.vmem [shape: f32[32,384], index: 0, kind: input, shape index: {}]
  %s1 = inlined_call_operand.vmem [shape: f32[160,32], index: 1, kind: input, shape index: {}]
  %s2 = inlined_call_operand.vmem [shape: f32[160,1], index: 2, kind: input, shape index: {}]
  %s3 = inlined_call_operand.vmem [shape: f32[32,160], index: 3, kind: input, shape index: {}]
  %s4 = inlined_call_operand.vmem [shape: f32[32,1], index: 4, kind: input, shape index: {}]
  %s5 = inlined_call_operand.vmem [shape: f32[40,32], index: 5, kind: input, shape index: {}]
  %s6 = inlined_call_operand.<no memory space> [shape: f32[1], index: 6, kind: input, shape index: {}]
  %s7 = inlined_call_operand.hbm [shape: f32[1,128], index: 7, kind: output, shape index: {}]
  %s8 = sld [smem:[#allocation0]]
  $region38: #{tpu_custom_call.1} parent=0
    _
  %s10 = ssub.s32 1, %s8
  %s11 = scalar_select 0, %s10, %s8
  %12 = sst [smem:[#allocation2]] %s6
  $region1: #{tpu_custom_call.1} parent=0
    #allocation3 [shape = 'u8[512]{0}', space=vmem, size = 0x400, scoped, tag = 'output window, operand 0, single buffered']
    #allocation4 [shape = 's32[1]{0}', space=sflag, size = 0x4, scoped, tag = 'scoped memory for tpu_custom_call.1']
    %13 = vsyncpa [#allocation4], 0
    // Predicated region
    $region2: #{tpu_custom_call.1} parent=1 // pred_check
      _
    $region3: #{tpu_custom_call.1} parent=1 // pred_check_branch
      %15 = sbr.rel (0) target = $region5
    $region4: #{tpu_custom_call.1} parent=1 // pred_region
      _
    $region5: #{tpu_custom_call.1} parent=1 // pred_fallthru
      _
    // Predicated region
    $region6: #{tpu_custom_call.1} parent=1 // pred_check
      _
    $region7: #{tpu_custom_call.1} parent=1 // pred_check_branch
      %17 = sbr.rel (0) target = $region9
    $region8: #{tpu_custom_call.1} parent=1 // pred_region
      _
    $region9: #{tpu_custom_call.1} parent=1 // pred_fallthru
      _
    // Predicated region
    $region10: #{tpu_custom_call.1} parent=1 // pred_check
      _
    $region11: #{tpu_custom_call.1} parent=1 // pred_check_branch
      %19 = sbr.rel (0) target = $region13
    $region12: #{tpu_custom_call.1} parent=1 // pred_region
      _
    $region13: #{tpu_custom_call.1} parent=1 // pred_fallthru
      _
    // Predicated region
    $region14: #{tpu_custom_call.1} parent=1 // pred_check
      _
    $region15: #{tpu_custom_call.1} parent=1 // pred_check_branch
      %21 = sbr.rel (0) target = $region17
    $region16: #{tpu_custom_call.1} parent=1 // pred_region
      _
    $region17: #{tpu_custom_call.1} parent=1 // pred_fallthru
      _
    // Predicated region
    $region18: #{tpu_custom_call.1} parent=1 // pred_check
      _
    $region19: #{tpu_custom_call.1} parent=1 // pred_check_branch
      %23 = sbr.rel (0) target = $region21
    $region20: #{tpu_custom_call.1} parent=1 // pred_region
      _
    $region21: #{tpu_custom_call.1} parent=1 // pred_fallthru
      _
    // Predicated region
    $region22: #{tpu_custom_call.1} parent=1 // pred_check
      _
    $region23: #{tpu_custom_call.1} parent=1 // pred_check_branch
      %25 = sbr.rel (0) target = $region25
    $region24: #{tpu_custom_call.1} parent=1 // pred_region
      _
    $region25: #{tpu_custom_call.1} parent=1 // pred_fallthru
      _
    // Predicated region
    $region26: #{tpu_custom_call.1} parent=1 // pred_check
      _
    $region27: #{tpu_custom_call.1} parent=1 // pred_check_branch
      %27 = sbr.rel (0) target = $region29
    $region28: #{tpu_custom_call.1} parent=1 // pred_region
      _
    $region29: #{tpu_custom_call.1} parent=1 // pred_fallthru
      _
    %v28 = vld [vmem:[%s0] sm:$0xff]
    %v29 = vld [vmem:[%s0 + $0x8] sm:$0xff]
    %v30 = vld [vmem:[%s0 + $0x10] sm:$0xff]
    %v31 = vld [vmem:[%s0 + $0x18] sm:$0xff]
    %v32 = vld [vmem:[%s0 + $0x20] sm:$0xff]
    %v33 = vld [vmem:[%s0 + $0x28] sm:$0xff]
    %v34 = vld [vmem:[%s0 + $0x30] sm:$0xff]
    %v35 = vld [vmem:[%s0 + $0x38] sm:$0xff]
    %v36 = vld [vmem:[%s0 + $0x40] sm:$0xff]
    %v37 = vld [vmem:[%s0 + $0x48] sm:$0xff]
    %v38 = vld [vmem:[%s0 + $0x50] sm:$0xff]
    %v39 = vld [vmem:[%s0 + $0x58] sm:$0xff]
    %v40 = vld [vmem:[%s1] sm:$0xff]
    %v41 = vld [vmem:[%s1 + $0x8] sm:$0xff]
    %v42 = vld [vmem:[%s1 + $0x10] sm:$0xff]
    %v43 = vld [vmem:[%s1 + $0x18] sm:$0xff]
    %v44 = vld [vmem:[%s1 + $0x20] sm:$0xff]
    %v45 = vld [vmem:[%s1 + $0x28] sm:$0xff]
    %v46 = vld [vmem:[%s1 + $0x30] sm:$0xff]
    %v47 = vld [vmem:[%s1 + $0x38] sm:$0xff]
    %v48 = vld [vmem:[%s1 + $0x40] sm:$0xff]
    %v49 = vld [vmem:[%s1 + $0x48] sm:$0xff]
    %v50 = vld [vmem:[%s1 + $0x50] sm:$0xff]
    %v51 = vld [vmem:[%s1 + $0x58] sm:$0xff]
    %v52 = vld [vmem:[%s1 + $0x60] sm:$0xff]
    %v53 = vld [vmem:[%s1 + $0x68] sm:$0xff]
    %v54 = vld [vmem:[%s1 + $0x70] sm:$0xff]
    %v55 = vld [vmem:[%s1 + $0x78] sm:$0xff]
    %v56 = vld [vmem:[%s1 + $0x80] sm:$0xff]
    %v57 = vld [vmem:[%s1 + $0x88] sm:$0xff]
    %v58 = vld [vmem:[%s1 + $0x90] sm:$0xff]
    %v59 = vld [vmem:[%s1 + $0x98] sm:$0xff]
    %v60 = vld [vmem:[%s2] sm:$0xff]
    %v61 = vld [vmem:[%s2 + $0x8] sm:$0xff]
    %v62 = vld [vmem:[%s2 + $0x10] sm:$0xff]
    %v63 = vld [vmem:[%s2 + $0x18] sm:$0xff]
    %v64 = vld [vmem:[%s2 + $0x20] sm:$0xff]
    %v65 = vld [vmem:[%s2 + $0x28] sm:$0xff]
    %v66 = vld [vmem:[%s2 + $0x30] sm:$0xff]
    %v67 = vld [vmem:[%s2 + $0x38] sm:$0xff]
    %v68 = vld [vmem:[%s2 + $0x40] sm:$0xff]
    %v69 = vld [vmem:[%s2 + $0x48] sm:$0xff]
    %v70 = vld [vmem:[%s2 + $0x50] sm:$0xff]
    %v71 = vld [vmem:[%s2 + $0x58] sm:$0xff]
    %v72 = vld [vmem:[%s2 + $0x60] sm:$0xff]
    %v73 = vld [vmem:[%s2 + $0x68] sm:$0xff]
    %v74 = vld [vmem:[%s2 + $0x70] sm:$0xff]
    %v75 = vld [vmem:[%s2 + $0x78] sm:$0xff]
    %v76 = vld [vmem:[%s2 + $0x80] sm:$0xff]
    %v77 = vld [vmem:[%s2 + $0x88] sm:$0xff]
    %v78 = vld [vmem:[%s2 + $0x90] sm:$0xff]
    %v79 = vld [vmem:[%s2 + $0x98] sm:$0xff]
    %81 = vset.pattern.permute.xlu0 0
    %82 = vperm.xlu0 %81, %v60
    %v83 = vpop.permute.xlu0 %82
    %86 = vset.pattern.permute.xlu0 0
    %87 = vperm.xlu0 %86, %v61
    %v88 = vpop.permute.xlu0 %87
    %91 = vset.pattern.permute.xlu0 0
    %92 = vperm.xlu0 %91, %v62
    %v93 = vpop.permute.xlu0 %92
    %96 = vset.pattern.permute.xlu0 0
    %97 = vperm.xlu0 %96, %v63
    %v98 = vpop.permute.xlu0 %97
    %101 = vset.pattern.permute.xlu0 0
    %102 = vperm.xlu0 %101, %v64
    %v103 = vpop.permute.xlu0 %102
    %106 = vset.pattern.permute.xlu0 0
    %107 = vperm.xlu0 %106, %v65
    %v108 = vpop.permute.xlu0 %107
    %111 = vset.pattern.permute.xlu0 0
    %112 = vperm.xlu0 %111, %v66
    %v113 = vpop.permute.xlu0 %112
    %116 = vset.pattern.permute.xlu0 0
    %117 = vperm.xlu0 %116, %v67
    %v118 = vpop.permute.xlu0 %117
    %121 = vset.pattern.permute.xlu0 0
    %122 = vperm.xlu0 %121, %v68
    %v123 = vpop.permute.xlu0 %122
    %126 = vset.pattern.permute.xlu0 0
    %127 = vperm.xlu0 %126, %v69
    %v128 = vpop.permute.xlu0 %127
    %131 = vset.pattern.permute.xlu0 0
    %132 = vperm.xlu0 %131, %v70
    %v133 = vpop.permute.xlu0 %132
    %136 = vset.pattern.permute.xlu0 0
    %137 = vperm.xlu0 %136, %v71
    %v138 = vpop.permute.xlu0 %137
    %141 = vset.pattern.permute.xlu0 0
    %142 = vperm.xlu0 %141, %v72
    %v143 = vpop.permute.xlu0 %142
    %146 = vset.pattern.permute.xlu0 0
    %147 = vperm.xlu0 %146, %v73
    %v148 = vpop.permute.xlu0 %147
    %151 = vset.pattern.permute.xlu0 0
    %152 = vperm.xlu0 %151, %v74
    %v153 = vpop.permute.xlu0 %152
    %156 = vset.pattern.permute.xlu0 0
    %157 = vperm.xlu0 %156, %v75
    %v158 = vpop.permute.xlu0 %157
    %161 = vset.pattern.permute.xlu0 0
    %162 = vperm.xlu0 %161, %v76
    %v163 = vpop.permute.xlu0 %162
    %166 = vset.pattern.permute.xlu0 0
    %167 = vperm.xlu0 %166, %v77
    %v168 = vpop.permute.xlu0 %167
    %171 = vset.pattern.permute.xlu0 0
    %172 = vperm.xlu0 %171, %v78
    %v173 = vpop.permute.xlu0 %172
    %176 = vset.pattern.permute.xlu0 0
    %177 = vperm.xlu0 %176, %v79
    %v178 = vpop.permute.xlu0 %177
    %vm180 = vcmask 261120
    %v182 = vsel %vm180, %v40, 0
    %v185 = vsel %vm180, %v41, 0
    %v188 = vsel %vm180, %v42, 0
    %v191 = vsel %vm180, %v43, 0
    %v194 = vsel %vm180, %v44, 0
    %v197 = vsel %vm180, %v45, 0
    %v200 = vsel %vm180, %v46, 0
    %v203 = vsel %vm180, %v47, 0
    %v206 = vsel %vm180, %v48, 0
    %v209 = vsel %vm180, %v49, 0
    %v212 = vsel %vm180, %v50, 0
    %v215 = vsel %vm180, %v51, 0
    %v218 = vsel %vm180, %v52, 0
    %v221 = vsel %vm180, %v53, 0
    %v224 = vsel %vm180, %v54, 0
    %v227 = vsel %vm180, %v55, 0
    %v230 = vsel %vm180, %v56, 0
    %v233 = vsel %vm180, %v57, 0
    %v236 = vsel %vm180, %v58, 0
    %v239 = vsel %vm180, %v59, 0
    %241 = vmatprep.subr.mxu0 %v29
    %242 = vmatpush1.msra.mxu0 %v28
    %243 = vmatprep.subr.mxu0 %v32
    %244 = vmatpush1.msra.mxu0 %v31
    %245 = vmatprep.subr.mxu0 %v35
    %246 = vmatpush1.msra.mxu0 %v34
    %247 = vmatprep.subr.mxu0 %v38
    %248 = vmatpush1.msra.mxu0 %v37
    %249 = vmatprep.subr.mxu0 0.0
    %250 = vmatpush1.msra.mxu0 0.0
    %251 = vmatprep.subr.mxu0 0.0
    %252 = vmatpush1.msra.mxu0 0.0
    %253 = vmatprep.subr.mxu0 0.0
    %254 = vmatpush1.msra.mxu0 0.0
    %255 = vmatprep.subr.mxu0 0.0
    %256 = vmatpush1.msra.mxu0 0.0
    %257 = vmatprep.subr.mxu0 0.0
    %258 = vmatpush1.msra.mxu0 0.0
    %259 = vmatprep.subr.mxu0 0.0
    %260 = vmatpush1.msra.mxu0 0.0
    %261 = vmatprep.subr.mxu0 0.0
    %262 = vmatpush1.msra.mxu0 0.0
    %263 = vmatprep.subr.mxu0 0.0
    %264 = vmatpush1.msra.mxu0 0.0
    %265 = vmatprep.subr.mxu0 0.0
    %266 = vmatpush1.msra.mxu0 0.0
    %267 = vmatprep.subr.mxu0 0.0
    %268 = vmatpush1.msra.mxu0 0.0
    %269 = vmatprep.subr.mxu0 0.0
    %270 = vmatpush1.msra.mxu0 0.0
    %271 = vmatprep.subr.mxu0 0.0
    %272 = vmatpush1.msra.mxu0 0.0
    %273 = vmatprep.subr.mxu0 0.0
    %274 = vmatpush1.msra.mxu0 0.0
    %275 = vmatprep.subr.mxu0 0.0
    %276 = vmatpush1.msra.mxu0 0.0
    %277 = vmatprep.subr.mxu0 0.0
    %278 = vmatpush1.msra.mxu0 0.0
    %279 = vmatprep.subr.mxu0 0.0
    %280 = vmatpush1.msra.mxu0 0.0
    %281 = vmatprep.subr.mxu0 0.0
    %282 = vmatpush1.msra.mxu0 0.0
    %283 = vmatprep.subr.mxu0 0.0
    %284 = vmatpush1.msra.mxu0 0.0
    %285 = vmatprep.subr.mxu0 0.0
    %286 = vmatpush1.msra.mxu0 0.0
    %287 = vmatprep.subr.mxu0 0.0
    %288 = vmatpush1.msra.mxu0 0.0
    %289 = vmatprep.subr.mxu0 0.0
    %290 = vmatpush1.msra.mxu0 0.0
    %291 = vmatprep.subr.mxu0 0.0
    %292 = vmatpush1.msra.mxu0 0.0
    %293 = vmatprep.subr.mxu0 0.0
    %294 = vmatpush1.msra.mxu0 0.0
    %295 = vmatprep.subr.mxu0 0.0
    %296 = vmatpush1.msra.mxu0 0.0
    %297 = vmatprep.subr.mxu0 0.0
    %298 = vmatpush1.msra.mxu0 0.0
    %299 = vmatprep.subr.mxu0 0.0
    %300 = vmatpush1.msra.mxu0 0.0
    %301 = vmatprep.subr.mxu0 0.0
    %302 = vmatpush1.msra.mxu0 0.0
    %303 = vmatprep.subr.mxu0 0.0
    %304 = vmatpush1.msra.mxu0 0.0
    %305 = vmatprep.mubr.f32.mxu0 0.0
    %306 = vmatmul.mubr.f32.gmra.mrb[0].mxu0 %v182
    %v307 = vpop.f32.mrb[0].mxu0
    %v308 = vadd.f32 %v83, %v307
    %v309 = vpop.f32.mrb[0].mxu0
    %v310 = vadd.f32 %v83, %v309
    %311 = vmatprep.mubr.f32.mxu0 0.0
    %312 = vmatmul.mubr.f32.gmra.mrb[0].mxu0 %v185
    %v313 = vpop.f32.mrb[0].mxu0
    %v314 = vadd.f32 %v88, %v313
    %v315 = vpop.f32.mrb[0].mxu0
    %v316 = vadd.f32 %v88, %v315
    %317 = vmatprep.mubr.f32.mxu0 0.0
    %318 = vmatmul.mubr.f32.gmra.mrb[0].mxu0 %v188
    %v319 = vpop.f32.mrb[0].mxu0
    %v320 = vadd.f32 %v93, %v319
    %v321 = vpop.f32.mrb[0].mxu0
    %v322 = vadd.f32 %v93, %v321
    %323 = vmatprep.mubr.f32.mxu0 0.0
    %324 = vmatmul.mubr.f32.gmra.mrb[0].mxu0 %v191
    %v325 = vpop.f32.mrb[0].mxu0
    %v326 = vadd.f32 %v98, %v325
    %v327 = vpop.f32.mrb[0].mxu0
    %v328 = vadd.f32 %v98, %v327
    %329 = vmatprep.mubr.f32.mxu0 0.0
    %330 = vmatmul.mubr.f32.gmra.mrb[0].mxu0 %v194
    %v331 = vpop.f32.mrb[0].mxu0
    %v332 = vadd.f32 %v103, %v331
    %v333 = vpop.f32.mrb[0].mxu0
    %v334 = vadd.f32 %v103, %v333
    %335 = vmatprep.mubr.f32.mxu0 0.0
    %336 = vmatmul.mubr.f32.gmra.mrb[0].mxu0 %v197
    %v337 = vpop.f32.mrb[0].mxu0
    %v338 = vadd.f32 %v108, %v337
    %v339 = vpop.f32.mrb[0].mxu0
    %v340 = vadd.f32 %v108, %v339
    %341 = vmatprep.mubr.f32.mxu0 0.0
    %342 = vmatmul.mubr.f32.gmra.mrb[0].mxu0 %v200
    %v343 = vpop.f32.mrb[0].mxu0
    %v344 = vadd.f32 %v113, %v343
    %v345 = vpop.f32.mrb[0].mxu0
    %v346 = vadd.f32 %v113, %v345
    %347 = vmatprep.mubr.f32.mxu0 0.0
    %348 = vmatmul.mubr.f32.gmra.mrb[0].mxu0 %v203
    %v349 = vpop.f32.mrb[0].mxu0
    %v350 = vadd.f32 %v118, %v349
    %v351 = vpop.f32.mrb[0].mxu0
    %v352 = vadd.f32 %v118, %v351
    %353 = vmatprep.mubr.f32.mxu0 0.0
    %354 = vmatmul.mubr.f32.gmra.mrb[0].mxu0 %v206
    %v355 = vpop.f32.mrb[0].mxu0
    %v356 = vadd.f32 %v123, %v355
    %v357 = vpop.f32.mrb[0].mxu0
    %v358 = vadd.f32 %v123, %v357
    %359 = vmatprep.mubr.f32.mxu0 0.0
    %360 = vmatmul.mubr.f32.gmra.mrb[0].mxu0 %v209
    %v361 = vpop.f32.mrb[0].mxu0
    %v362 = vadd.f32 %v128, %v361
    %v363 = vpop.f32.mrb[0].mxu0
    %v364 = vadd.f32 %v128, %v363
    %365 = vmatprep.mubr.f32.mxu0 0.0
    %366 = vmatmul.mubr.f32.gmra.mrb[0].mxu0 %v212
    %v367 = vpop.f32.mrb[0].mxu0
    %v368 = vadd.f32 %v133, %v367
    %v369 = vpop.f32.mrb[0].mxu0
    %v370 = vadd.f32 %v133, %v369
    %371 = vmatprep.mubr.f32.mxu0 0.0
    %372 = vmatmul.mubr.f32.gmra.mrb[0].mxu0 %v215
    %v373 = vpop.f32.mrb[0].mxu0
    %v374 = vadd.f32 %v138, %v373
    %v375 = vpop.f32.mrb[0].mxu0
    %v376 = vadd.f32 %v138, %v375
    %377 = vmatprep.mubr.f32.mxu0 0.0
    %378 = vmatmul.mubr.f32.gmra.mrb[0].mxu0 %v218
    %v379 = vpop.f32.mrb[0].mxu0
    %v380 = vadd.f32 %v143, %v379
    %v381 = vpop.f32.mrb[0].mxu0
    %v382 = vadd.f32 %v143, %v381
    %383 = vmatprep.mubr.f32.mxu0 0.0
    %384 = vmatmul.mubr.f32.gmra.mrb[0].mxu0 %v221
    %v385 = vpop.f32.mrb[0].mxu0
    %v386 = vadd.f32 %v148, %v385
    %v387 = vpop.f32.mrb[0].mxu0
    %v388 = vadd.f32 %v148, %v387
    %389 = vmatprep.mubr.f32.mxu0 0.0
    %390 = vmatmul.mubr.f32.gmra.mrb[0].mxu0 %v224
    %v391 = vpop.f32.mrb[0].mxu0
    %v392 = vadd.f32 %v153, %v391
    %v393 = vpop.f32.mrb[0].mxu0
    %v394 = vadd.f32 %v153, %v393
    %395 = vmatprep.mubr.f32.mxu0 0.0
    %396 = vmatmul.mubr.f32.gmra.mrb[0].mxu0 %v227
    %v397 = vpop.f32.mrb[0].mxu0
    %v398 = vadd.f32 %v158, %v397
    %v399 = vpop.f32.mrb[0].mxu0
    %v400 = vadd.f32 %v158, %v399
    %401 = vmatprep.mubr.f32.mxu0 0.0
    %402 = vmatmul.mubr.f32.gmra.mrb[0].mxu0 %v230
    %v403 = vpop.f32.mrb[0].mxu0
    %v404 = vadd.f32 %v163, %v403
    %v405 = vpop.f32.mrb[0].mxu0
    %v406 = vadd.f32 %v163, %v405
    %407 = vmatprep.mubr.f32.mxu0 0.0
    %408 = vmatmul.mubr.f32.gmra.mrb[0].mxu0 %v233
    %v409 = vpop.f32.mrb[0].mxu0
    %v410 = vadd.f32 %v168, %v409
    %v411 = vpop.f32.mrb[0].mxu0
    %v412 = vadd.f32 %v168, %v411
    %413 = vmatprep.mubr.f32.mxu0 0.0
    %414 = vmatmul.mubr.f32.gmra.mrb[0].mxu0 %v236
    %v415 = vpop.f32.mrb[0].mxu0
    %v416 = vadd.f32 %v173, %v415
    %v417 = vpop.f32.mrb[0].mxu0
    %v418 = vadd.f32 %v173, %v417
    %419 = vmatprep.mubr.f32.mxu0 0.0
    %420 = vmatmul.mubr.f32.gmra.mrb[0].mxu0 %v239
    %v421 = vpop.f32.mrb[0].mxu0
    %v422 = vadd.f32 %v178, %v421
    %v423 = vpop.f32.mrb[0].mxu0
    %v424 = vadd.f32 %v178, %v423
    %425 = vdwg.mxu0
    %426 = vmatprep.subr.mxu0 0.0
    %427 = vmatpush1.msra.mxu0 %v30
    %428 = vmatprep.subr.mxu0 0.0
    %429 = vmatpush1.msra.mxu0 %v33
    %430 = vmatprep.subr.mxu0 0.0
    %431 = vmatpush1.msra.mxu0 %v36
    %432 = vmatprep.subr.mxu0 0.0
    %433 = vmatpush1.msra.mxu0 %v39
    %434 = vmatprep.subr.mxu0 0.0
    %435 = vmatpush1.msra.mxu0 0.0
    %436 = vmatprep.subr.mxu0 0.0
    %437 = vmatpush1.msra.mxu0 0.0
    %438 = vmatprep.subr.mxu0 0.0
    %439 = vmatpush1.msra.mxu0 0.0
    %440 = vmatprep.subr.mxu0 0.0
    %441 = vmatpush1.msra.mxu0 0.0
    %442 = vmatprep.subr.mxu0 0.0
    %443 = vmatpush1.msra.mxu0 0.0
    %444 = vmatprep.subr.mxu0 0.0
    %445 = vmatpush1.msra.mxu0 0.0
    %446 = vmatprep.subr.mxu0 0.0
    %447 = vmatpush1.msra.mxu0 0.0
    %448 = vmatprep.subr.mxu0 0.0
    %449 = vmatpush1.msra.mxu0 0.0
    %450 = vmatprep.subr.mxu0 0.0
    %451 = vmatpush1.msra.mxu0 0.0
    %452 = vmatprep.subr.mxu0 0.0
    %453 = vmatpush1.msra.mxu0 0.0
    %454 = vmatprep.subr.mxu0 0.0
    %455 = vmatpush1.msra.mxu0 0.0
    %456 = vmatprep.subr.mxu0 0.0
    %457 = vmatpush1.msra.mxu0 0.0
    %458 = vmatprep.subr.mxu0 0.0
    %459 = vmatpush1.msra.mxu0 0.0
    %460 = vmatprep.subr.mxu0 0.0
    %461 = vmatpush1.msra.mxu0 0.0
    %462 = vmatprep.subr.mxu0 0.0
    %463 = vmatpush1.msra.mxu0 0.0
    %464 = vmatprep.subr.mxu0 0.0
    %465 = vmatpush1.msra.mxu0 0.0
    %466 = vmatprep.subr.mxu0 0.0
    %467 = vmatpush1.msra.mxu0 0.0
    %468 = vmatprep.subr.mxu0 0.0
    %469 = vmatpush1.msra.mxu0 0.0
    %470 = vmatprep.subr.mxu0 0.0
    %471 = vmatpush1.msra.mxu0 0.0
    %472 = vmatprep.subr.mxu0 0.0
    %473 = vmatpush1.msra.mxu0 0.0
    %474 = vmatprep.subr.mxu0 0.0
    %475 = vmatpush1.msra.mxu0 0.0
    %476 = vmatprep.subr.mxu0 0.0
    %477 = vmatpush1.msra.mxu0 0.0
    %478 = vmatprep.subr.mxu0 0.0
    %479 = vmatpush1.msra.mxu0 0.0
    %480 = vmatprep.subr.mxu0 0.0
    %481 = vmatpush1.msra.mxu0 0.0
    %482 = vmatprep.subr.mxu0 0.0
    %483 = vmatpush1.msra.mxu0 0.0
    %484 = vmatprep.subr.mxu0 0.0
    %485 = vmatpush1.msra.mxu0 0.0
    %486 = vmatprep.subr.mxu0 0.0
    %487 = vmatpush1.msra.mxu0 0.0
    %488 = vmatprep.subr.mxu0 0.0
    %489 = vmatpush1.msra.mxu0 0.0
    %490 = vmatprep.mubr.f32.mxu0 0.0
    %491 = vmatmul.mubr.f32.gmra.mrb[0].mxu0 %v182
    %v492 = vpop.f32.mrb[0].mxu0
    %v493 = vadd.f32 %v83, %v492
    %v494 = vpop.f32.mrb[0].mxu0
    %495 = vmatprep.mubr.f32.mxu0 0.0
    %496 = vmatmul.mubr.f32.gmra.mrb[0].mxu0 %v185
    %v497 = vpop.f32.mrb[0].mxu0
    %v498 = vadd.f32 %v88, %v497
    %v499 = vpop.f32.mrb[0].mxu0
    %500 = vmatprep.mubr.f32.mxu0 0.0
    %501 = vmatmul.mubr.f32.gmra.mrb[0].mxu0 %v188
    %v502 = vpop.f32.mrb[0].mxu0
    %v503 = vadd.f32 %v93, %v502
    %v504 = vpop.f32.mrb[0].mxu0
    %505 = vmatprep.mubr.f32.mxu0 0.0
    %506 = vmatmul.mubr.f32.gmra.mrb[0].mxu0 %v191
    %v507 = vpop.f32.mrb[0].mxu0
    %v508 = vadd.f32 %v98, %v507
    %v509 = vpop.f32.mrb[0].mxu0
    %510 = vmatprep.mubr.f32.mxu0 0.0
    %511 = vmatmul.mubr.f32.gmra.mrb[0].mxu0 %v194
    %v512 = vpop.f32.mrb[0].mxu0
    %v513 = vadd.f32 %v103, %v512
    %v514 = vpop.f32.mrb[0].mxu0
    %515 = vmatprep.mubr.f32.mxu0 0.0
    %516 = vmatmul.mubr.f32.gmra.mrb[0].mxu0 %v197
    %v517 = vpop.f32.mrb[0].mxu0
    %v518 = vadd.f32 %v108, %v517
    %v519 = vpop.f32.mrb[0].mxu0
    %520 = vmatprep.mubr.f32.mxu0 0.0
    %521 = vmatmul.mubr.f32.gmra.mrb[0].mxu0 %v200
    %v522 = vpop.f32.mrb[0].mxu0
    %v523 = vadd.f32 %v113, %v522
    %v524 = vpop.f32.mrb[0].mxu0
    %525 = vmatprep.mubr.f32.mxu0 0.0
    %526 = vmatmul.mubr.f32.gmra.mrb[0].mxu0 %v203
    %v527 = vpop.f32.mrb[0].mxu0
    %v528 = vadd.f32 %v118, %v527
    %v529 = vpop.f32.mrb[0].mxu0
    %530 = vmatprep.mubr.f32.mxu0 0.0
    %531 = vmatmul.mubr.f32.gmra.mrb[0].mxu0 %v206
    %v532 = vpop.f32.mrb[0].mxu0
    %v533 = vadd.f32 %v123, %v532
    %v534 = vpop.f32.mrb[0].mxu0
    %535 = vmatprep.mubr.f32.mxu0 0.0
    %536 = vmatmul.mubr.f32.gmra.mrb[0].mxu0 %v209
    %v537 = vpop.f32.mrb[0].mxu0
    %v538 = vadd.f32 %v128, %v537
    %v539 = vpop.f32.mrb[0].mxu0
    %540 = vmatprep.mubr.f32.mxu0 0.0
    %541 = vmatmul.mubr.f32.gmra.mrb[0].mxu0 %v212
    %v542 = vpop.f32.mrb[0].mxu0
    %v543 = vadd.f32 %v133, %v542
    %v544 = vpop.f32.mrb[0].mxu0
    %545 = vmatprep.mubr.f32.mxu0 0.0
    %546 = vmatmul.mubr.f32.gmra.mrb[0].mxu0 %v215
    %v547 = vpop.f32.mrb[0].mxu0
    %v548 = vadd.f32 %v138, %v547
    %v549 = vpop.f32.mrb[0].mxu0
    %550 = vmatprep.mubr.f32.mxu0 0.0
    %551 = vmatmul.mubr.f32.gmra.mrb[0].mxu0 %v218
    %v552 = vpop.f32.mrb[0].mxu0
    %v553 = vadd.f32 %v143, %v552
    %v554 = vpop.f32.mrb[0].mxu0
    %555 = vmatprep.mubr.f32.mxu0 0.0
    %556 = vmatmul.mubr.f32.gmra.mrb[0].mxu0 %v221
    %v557 = vpop.f32.mrb[0].mxu0
    %v558 = vadd.f32 %v148, %v557
    %v559 = vpop.f32.mrb[0].mxu0
    %560 = vmatprep.mubr.f32.mxu0 0.0
    %561 = vmatmul.mubr.f32.gmra.mrb[0].mxu0 %v224
    %v562 = vpop.f32.mrb[0].mxu0
    %v563 = vadd.f32 %v153, %v562
    %v564 = vpop.f32.mrb[0].mxu0
    %565 = vmatprep.mubr.f32.mxu0 0.0
    %566 = vmatmul.mubr.f32.gmra.mrb[0].mxu0 %v227
    %v567 = vpop.f32.mrb[0].mxu0
    %v568 = vadd.f32 %v158, %v567
    %v569 = vpop.f32.mrb[0].mxu0
    %570 = vmatprep.mubr.f32.mxu0 0.0
    %571 = vmatmul.mubr.f32.gmra.mrb[0].mxu0 %v230
    %v572 = vpop.f32.mrb[0].mxu0
    %v573 = vadd.f32 %v163, %v572
    %v574 = vpop.f32.mrb[0].mxu0
    %575 = vmatprep.mubr.f32.mxu0 0.0
    %576 = vmatmul.mubr.f32.gmra.mrb[0].mxu0 %v233
    %v577 = vpop.f32.mrb[0].mxu0
    %v578 = vadd.f32 %v168, %v577
    %v579 = vpop.f32.mrb[0].mxu0
    %580 = vmatprep.mubr.f32.mxu0 0.0
    %581 = vmatmul.mubr.f32.gmra.mrb[0].mxu0 %v236
    %v582 = vpop.f32.mrb[0].mxu0
    %v583 = vadd.f32 %v173, %v582
    %v584 = vpop.f32.mrb[0].mxu0
    %585 = vmatprep.mubr.f32.mxu0 0.0
    %586 = vmatmul.mubr.f32.gmra.mrb[0].mxu0 %v239
    %v587 = vpop.f32.mrb[0].mxu0
    %v588 = vadd.f32 %v178, %v587
    %v589 = vpop.f32.mrb[0].mxu0
    %590 = vdwg.mxu0
    %v591 = vmax.f32 %v308, 0.0
    %v592 = vmax.f32 %v310, 0.0
    %v593 = vmax.f32 %v493, 0.0
    %v594 = vmax.f32 %v314, 0.0
    %v595 = vmax.f32 %v316, 0.0
    %v596 = vmax.f32 %v498, 0.0
    %v597 = vmax.f32 %v320, 0.0
    %v598 = vmax.f32 %v322, 0.0
    %v599 = vmax.f32 %v503, 0.0
    %v600 = vmax.f32 %v326, 0.0
    %v601 = vmax.f32 %v328, 0.0
    %v602 = vmax.f32 %v508, 0.0
    %v603 = vmax.f32 %v332, 0.0
    %v604 = vmax.f32 %v334, 0.0
    %v605 = vmax.f32 %v513, 0.0
    %v606 = vmax.f32 %v338, 0.0
    %v607 = vmax.f32 %v340, 0.0
    %v608 = vmax.f32 %v518, 0.0
    %v609 = vmax.f32 %v344, 0.0
    %v610 = vmax.f32 %v346, 0.0
    %v611 = vmax.f32 %v523, 0.0
    %v612 = vmax.f32 %v350, 0.0
    %v613 = vmax.f32 %v352, 0.0
    %v614 = vmax.f32 %v528, 0.0
    %v615 = vmax.f32 %v356, 0.0
    %v616 = vmax.f32 %v358, 0.0
    %v617 = vmax.f32 %v533, 0.0
    %v618 = vmax.f32 %v362, 0.0
    %v619 = vmax.f32 %v364, 0.0
    %v620 = vmax.f32 %v538, 0.0
    %v621 = vmax.f32 %v368, 0.0
    %v622 = vmax.f32 %v370, 0.0
    %v623 = vmax.f32 %v543, 0.0
    %v624 = vmax.f32 %v374, 0.0
    %v625 = vmax.f32 %v376, 0.0
    %v626 = vmax.f32 %v548, 0.0
    %v627 = vmax.f32 %v380, 0.0
    %v628 = vmax.f32 %v382, 0.0
    %v629 = vmax.f32 %v553, 0.0
    %v630 = vmax.f32 %v386, 0.0
    %v631 = vmax.f32 %v388, 0.0
    %v632 = vmax.f32 %v558, 0.0
    %v633 = vmax.f32 %v392, 0.0
    %v634 = vmax.f32 %v394, 0.0
    %v635 = vmax.f32 %v563, 0.0
    %v636 = vmax.f32 %v398, 0.0
    %v637 = vmax.f32 %v400, 0.0
    %v638 = vmax.f32 %v568, 0.0
    %v639 = vmax.f32 %v404, 0.0
    %v640 = vmax.f32 %v406, 0.0
    %v641 = vmax.f32 %v573, 0.0
    %v642 = vmax.f32 %v410, 0.0
    %v643 = vmax.f32 %v412, 0.0
    %v644 = vmax.f32 %v578, 0.0
    %v645 = vmax.f32 %v416, 0.0
    %v646 = vmax.f32 %v418, 0.0
    %v647 = vmax.f32 %v583, 0.0
    %v648 = vmax.f32 %v422, 0.0
    %v649 = vmax.f32 %v424, 0.0
    %v650 = vmax.f32 %v588, 0.0
    %v651 = vld [vmem:[%s3] sm:$0xff]
    %v652 = vld [vmem:[%s3 + $0x8] sm:$0xff]
    %v653 = vld [vmem:[%s3 + $0x10] sm:$0xff]
    %v654 = vld [vmem:[%s3 + $0x18] sm:$0xff]
    %v655 = vld [vmem:[%s3 + $0x20] sm:$0xff]
    %v656 = vld [vmem:[%s3 + $0x28] sm:$0xff]
    %v657 = vld [vmem:[%s3 + $0x30] sm:$0xff]
    %v658 = vld [vmem:[%s3 + $0x38] sm:$0xff]
    %v659 = vld [vmem:[%s4] sm:$0xff]
    %v660 = vld [vmem:[%s4 + $0x8] sm:$0xff]
    %v661 = vld [vmem:[%s4 + $0x10] sm:$0xff]
    %v662 = vld [vmem:[%s4 + $0x18] sm:$0xff]
    %664 = vset.pattern.permute.xlu0 0
    %665 = vperm.xlu0 %664, %v659
    %v666 = vpop.permute.xlu0 %665
    %669 = vset.pattern.permute.xlu0 0
    %670 = vperm.xlu0 %669, %v660
    %v671 = vpop.permute.xlu0 %670
    %674 = vset.pattern.permute.xlu0 0
    %675 = vperm.xlu0 %674, %v661
    %v676 = vpop.permute.xlu0 %675
    %679 = vset.pattern.permute.xlu0 0
    %680 = vperm.xlu0 %679, %v662
    %v681 = vpop.permute.xlu0 %680
    %v684 = vsel %vm180, %v652, 0
    %v687 = vsel %vm180, %v654, 0
    %v690 = vsel %vm180, %v656, 0
    %v693 = vsel %vm180, %v658, 0
    %695 = vmatprep.subr.mxu0 %v592
    %696 = vmatpush1.msra.mxu0 %v591
    %697 = vmatprep.subr.mxu0 %v595
    %698 = vmatpush1.msra.mxu0 %v594
    %699 = vmatprep.subr.mxu0 %v598
    %700 = vmatpush1.msra.mxu0 %v597
    %701 = vmatprep.subr.mxu0 %v601
    %702 = vmatpush1.msra.mxu0 %v600
    %703 = vmatprep.subr.mxu0 %v604
    %704 = vmatpush1.msra.mxu0 %v603
    %705 = vmatprep.subr.mxu0 %v607
    %706 = vmatpush1.msra.mxu0 %v606
    %707 = vmatprep.subr.mxu0 %v610
    %708 = vmatpush1.msra.mxu0 %v609
    %709 = vmatprep.subr.mxu0 %v613
    %710 = vmatpush1.msra.mxu0 %v612
    %711 = vmatprep.subr.mxu0 %v616
    %712 = vmatpush1.msra.mxu0 %v615
    %713 = vmatprep.subr.mxu0 %v619
    %714 = vmatpush1.msra.mxu0 %v618
    %715 = vmatprep.subr.mxu0 %v622
    %716 = vmatpush1.msra.mxu0 %v621
    %717 = vmatprep.subr.mxu0 %v625
    %718 = vmatpush1.msra.mxu0 %v624
    %719 = vmatprep.subr.mxu0 %v628
    %720 = vmatpush1.msra.mxu0 %v627
    %721 = vmatprep.subr.mxu0 %v631
    %722 = vmatpush1.msra.mxu0 %v630
    %723 = vmatprep.subr.mxu0 %v634
    %724 = vmatpush1.msra.mxu0 %v633
    %725 = vmatprep.subr.mxu0 %v637
    %726 = vmatpush1.msra.mxu0 %v636
    %727 = vmatprep.subr.mxu0 %v640
    %728 = vmatpush1.msra.mxu0 %v639
    %729 = vmatprep.subr.mxu0 %v643
    %730 = vmatpush1.msra.mxu0 %v642
    %731 = vmatprep.subr.mxu0 %v646
    %732 = vmatpush1.msra.mxu0 %v645
    %733 = vmatprep.subr.mxu0 %v649
    %734 = vmatpush1.msra.mxu0 %v648
    %735 = vmatprep.subr.mxu0 0.0
    %736 = vmatpush1.msra.mxu0 0.0
    %737 = vmatprep.subr.mxu0 0.0
    %738 = vmatpush1.msra.mxu0 0.0
    %739 = vmatprep.subr.mxu0 0.0
    %740 = vmatpush1.msra.mxu0 0.0
    %741 = vmatprep.subr.mxu0 0.0
    %742 = vmatpush1.msra.mxu0 0.0
    %743 = vmatprep.subr.mxu0 0.0
    %744 = vmatpush1.msra.mxu0 0.0
    %745 = vmatprep.subr.mxu0 0.0
    %746 = vmatpush1.msra.mxu0 0.0
    %747 = vmatprep.subr.mxu0 0.0
    %748 = vmatpush1.msra.mxu0 0.0
    %749 = vmatprep.subr.mxu0 0.0
    %750 = vmatpush1.msra.mxu0 0.0
    %751 = vmatprep.subr.mxu0 0.0
    %752 = vmatpush1.msra.mxu0 0.0
    %753 = vmatprep.subr.mxu0 0.0
    %754 = vmatpush1.msra.mxu0 0.0
    %755 = vmatprep.subr.mxu0 0.0
    %756 = vmatpush1.msra.mxu0 0.0
    %757 = vmatprep.subr.mxu0 0.0
    %758 = vmatpush1.msra.mxu0 0.0
    %759 = vmatprep.mubr.f32.mxu0 %v684
    %760 = vmatmul.mubr.f32.gmra.mrb[0].mxu0 %v651
    %v761 = vpop.f32.mrb[0].mxu0
    %v762 = vadd.f32 %v666, %v761
    %v763 = vpop.f32.mrb[0].mxu0
    %v764 = vadd.f32 %v666, %v763
    %765 = vmatprep.mubr.f32.mxu0 %v687
    %766 = vmatmul.mubr.f32.gmra.mrb[0].mxu0 %v653
    %v767 = vpop.f32.mrb[0].mxu0
    %v768 = vadd.f32 %v671, %v767
    %v769 = vpop.f32.mrb[0].mxu0
    %v770 = vadd.f32 %v671, %v769
    %771 = vmatprep.mubr.f32.mxu0 %v690
    %772 = vmatmul.mubr.f32.gmra.mrb[0].mxu0 %v655
    %v773 = vpop.f32.mrb[0].mxu0
    %v774 = vadd.f32 %v676, %v773
    %v775 = vpop.f32.mrb[0].mxu0
    %v776 = vadd.f32 %v676, %v775
    %777 = vmatprep.mubr.f32.mxu0 %v693
    %778 = vmatmul.mubr.f32.gmra.mrb[0].mxu0 %v657
    %v779 = vpop.f32.mrb[0].mxu0
    %v780 = vadd.f32 %v681, %v779
    %v781 = vpop.f32.mrb[0].mxu0
    %v782 = vadd.f32 %v681, %v781
    %783 = vdwg.mxu0
    %784 = vmatprep.subr.mxu0 0.0
    %785 = vmatpush1.msra.mxu0 %v593
    %786 = vmatprep.subr.mxu0 0.0
    %787 = vmatpush1.msra.mxu0 %v596
    %788 = vmatprep.subr.mxu0 0.0
    %789 = vmatpush1.msra.mxu0 %v599
    %790 = vmatprep.subr.mxu0 0.0
    %791 = vmatpush1.msra.mxu0 %v602
    %792 = vmatprep.subr.mxu0 0.0
    %793 = vmatpush1.msra.mxu0 %v605
    %794 = vmatprep.subr.mxu0 0.0
    %795 = vmatpush1.msra.mxu0 %v608
    %796 = vmatprep.subr.mxu0 0.0
    %797 = vmatpush1.msra.mxu0 %v611
    %798 = vmatprep.subr.mxu0 0.0
    %799 = vmatpush1.msra.mxu0 %v614
    %800 = vmatprep.subr.mxu0 0.0
    %801 = vmatpush1.msra.mxu0 %v617
    %802 = vmatprep.subr.mxu0 0.0
    %803 = vmatpush1.msra.mxu0 %v620
    %804 = vmatprep.subr.mxu0 0.0
    %805 = vmatpush1.msra.mxu0 %v623
    %806 = vmatprep.subr.mxu0 0.0
    %807 = vmatpush1.msra.mxu0 %v626
    %808 = vmatprep.subr.mxu0 0.0
    %809 = vmatpush1.msra.mxu0 %v629
    %810 = vmatprep.subr.mxu0 0.0
    %811 = vmatpush1.msra.mxu0 %v632
    %812 = vmatprep.subr.mxu0 0.0
    %813 = vmatpush1.msra.mxu0 %v635
    %814 = vmatprep.subr.mxu0 0.0
    %815 = vmatpush1.msra.mxu0 %v638
    %816 = vmatprep.subr.mxu0 0.0
    %817 = vmatpush1.msra.mxu0 %v641
    %818 = vmatprep.subr.mxu0 0.0
    %819 = vmatpush1.msra.mxu0 %v644
    %820 = vmatprep.subr.mxu0 0.0
    %821 = vmatpush1.msra.mxu0 %v647
    %822 = vmatprep.subr.mxu0 0.0
    %823 = vmatpush1.msra.mxu0 %v650
    %824 = vmatprep.subr.mxu0 0.0
    %825 = vmatpush1.msra.mxu0 0.0
    %826 = vmatprep.subr.mxu0 0.0
    %827 = vmatpush1.msra.mxu0 0.0
    %828 = vmatprep.subr.mxu0 0.0
    %829 = vmatpush1.msra.mxu0 0.0
    %830 = vmatprep.subr.mxu0 0.0
    %831 = vmatpush1.msra.mxu0 0.0
    %832 = vmatprep.subr.mxu0 0.0
    %833 = vmatpush1.msra.mxu0 0.0
    %834 = vmatprep.subr.mxu0 0.0
    %835 = vmatpush1.msra.mxu0 0.0
    %836 = vmatprep.subr.mxu0 0.0
    %837 = vmatpush1.msra.mxu0 0.0
    %838 = vmatprep.subr.mxu0 0.0
    %839 = vmatpush1.msra.mxu0 0.0
    %840 = vmatprep.subr.mxu0 0.0
    %841 = vmatpush1.msra.mxu0 0.0
    %842 = vmatprep.subr.mxu0 0.0
    %843 = vmatpush1.msra.mxu0 0.0
    %844 = vmatprep.subr.mxu0 0.0
    %845 = vmatpush1.msra.mxu0 0.0
    %846 = vmatprep.subr.mxu0 0.0
    %847 = vmatpush1.msra.mxu0 0.0
    %848 = vmatprep.mubr.f32.mxu0 %v684
    %849 = vmatmul.mubr.f32.gmra.mrb[0].mxu0 %v651
    %v850 = vpop.f32.mrb[0].mxu0
    %v851 = vadd.f32 %v666, %v850
    %v852 = vpop.f32.mrb[0].mxu0
    %853 = vmatprep.mubr.f32.mxu0 %v687
    %854 = vmatmul.mubr.f32.gmra.mrb[0].mxu0 %v653
    %v855 = vpop.f32.mrb[0].mxu0
    %v856 = vadd.f32 %v671, %v855
    %v857 = vpop.f32.mrb[0].mxu0
    %858 = vmatprep.mubr.f32.mxu0 %v690
    %859 = vmatmul.mubr.f32.gmra.mrb[0].mxu0 %v655
    %v860 = vpop.f32.mrb[0].mxu0
    %v861 = vadd.f32 %v676, %v860
    %v862 = vpop.f32.mrb[0].mxu0
    %863 = vmatprep.mubr.f32.mxu0 %v693
    %864 = vmatmul.mubr.f32.gmra.mrb[0].mxu0 %v657
    %v865 = vpop.f32.mrb[0].mxu0
    %v866 = vadd.f32 %v681, %v865
    %v867 = vpop.f32.mrb[0].mxu0
    %868 = vdwg.mxu0
    %v869 = vmax.f32 %v762, 0.0
    %v870 = vmax.f32 %v764, 0.0
    %v871 = vmax.f32 %v851, 0.0
    %v872 = vmax.f32 %v768, 0.0
    %v873 = vmax.f32 %v770, 0.0
    %v874 = vmax.f32 %v856, 0.0
    %v875 = vmax.f32 %v774, 0.0
    %v876 = vmax.f32 %v776, 0.0
    %v877 = vmax.f32 %v861, 0.0
    %v878 = vmax.f32 %v780, 0.0
    %v879 = vmax.f32 %v782, 0.0
    %v880 = vmax.f32 %v866, 0.0
    %v881 = vld [vmem:[%s5] sm:$0xff]
    %v882 = vld [vmem:[%s5 + $0x8] sm:$0xff]
    %v883 = vld [vmem:[%s5 + $0x10] sm:$0xff]
    %v884 = vld [vmem:[%s5 + $0x18] sm:$0xff]
    %v885 = vld [vmem:[%s5 + $0x20] sm:$0xff]
    %v887 = vsel %vm180, %v882, 0
    %889 = vmatprep.subr.mxu0 0.0
    %890 = vmatpush1.msra.mxu0 %v871
    %891 = vmatprep.subr.mxu0 0.0
    %892 = vmatpush1.msra.mxu0 %v874
    %893 = vmatprep.subr.mxu0 0.0
    %894 = vmatpush1.msra.mxu0 %v877
    %895 = vmatprep.subr.mxu0 0.0
    %896 = vmatpush1.msra.mxu0 %v880
    %897 = vmatprep.subr.mxu0 0.0
    %898 = vmatpush1.msra.mxu0 0.0
    %899 = vmatprep.subr.mxu0 0.0
    %900 = vmatpush1.msra.mxu0 0.0
    %901 = vmatprep.subr.mxu0 0.0
    %902 = vmatpush1.msra.mxu0 0.0
    %903 = vmatprep.subr.mxu0 0.0
    %904 = vmatpush1.msra.mxu0 0.0
    %905 = vmatprep.subr.mxu0 0.0
    %906 = vmatpush1.msra.mxu0 0.0
    %907 = vmatprep.subr.mxu0 0.0
    %908 = vmatpush1.msra.mxu0 0.0
    %909 = vmatprep.subr.mxu0 0.0
    %910 = vmatpush1.msra.mxu0 0.0
    %911 = vmatprep.subr.mxu0 0.0
    %912 = vmatpush1.msra.mxu0 0.0
    %913 = vmatprep.subr.mxu0 0.0
    %914 = vmatpush1.msra.mxu0 0.0
    %915 = vmatprep.subr.mxu0 0.0
    %916 = vmatpush1.msra.mxu0 0.0
    %917 = vmatprep.subr.mxu0 0.0
    %918 = vmatpush1.msra.mxu0 0.0
    %919 = vmatprep.subr.mxu0 0.0
    %920 = vmatpush1.msra.mxu0 0.0
    %921 = vmatprep.subr.mxu0 0.0
    %922 = vmatpush1.msra.mxu0 0.0
    %923 = vmatprep.subr.mxu0 0.0
    %924 = vmatpush1.msra.mxu0 0.0
    %925 = vmatprep.subr.mxu0 0.0
    %926 = vmatpush1.msra.mxu0 0.0
    %927 = vmatprep.subr.mxu0 0.0
    %928 = vmatpush1.msra.mxu0 0.0
    %929 = vmatprep.subr.mxu0 0.0
    %930 = vmatpush1.msra.mxu0 0.0
    %931 = vmatprep.subr.mxu0 0.0
    %932 = vmatpush1.msra.mxu0 0.0
    %933 = vmatprep.subr.mxu0 0.0
    %934 = vmatpush1.msra.mxu0 0.0
    %935 = vmatprep.subr.mxu0 0.0
    %936 = vmatpush1.msra.mxu0 0.0
    %937 = vmatprep.subr.mxu0 0.0
    %938 = vmatpush1.msra.mxu0 0.0
    %939 = vmatprep.subr.mxu0 0.0
    %940 = vmatpush1.msra.mxu0 0.0
    %941 = vmatprep.subr.mxu0 0.0
    %942 = vmatpush1.msra.mxu0 0.0
    %943 = vmatprep.subr.mxu0 0.0
    %944 = vmatpush1.msra.mxu0 0.0
    %945 = vmatprep.subr.mxu0 0.0
    %946 = vmatpush1.msra.mxu0 0.0
    %947 = vmatprep.subr.mxu0 0.0
    %948 = vmatpush1.msra.mxu0 0.0
    %949 = vmatprep.subr.mxu0 0.0
    %950 = vmatpush1.msra.mxu0 0.0
    %951 = vmatprep.subr.mxu0 0.0
    %952 = vmatpush1.msra.mxu0 0.0
    %953 = vmatprep.mubr.f32.mxu0 0.0
    %954 = vmatmul.mubr.f32.gmra.mrb[0].mxu0 %v887
    %v955 = vpop.f32.mrb[0].mxu0
    %v956 = vadd.f32 0.0, %v955
    %v957 = vpop.f32.mrb[0].mxu0
    %958 = vdwg.mxu0
    %v960 = vsel %vm180, %v881, 0
    %962 = vmatprep.subr.mxu0 0.0
    %963 = vmatpush1.msra.mxu0 %v870
    %964 = vmatprep.subr.mxu0 0.0
    %965 = vmatpush1.msra.mxu0 %v873
    %966 = vmatprep.subr.mxu0 0.0
    %967 = vmatpush1.msra.mxu0 %v876
    %968 = vmatprep.subr.mxu0 0.0
    %969 = vmatpush1.msra.mxu0 %v879
    %970 = vmatprep.subr.mxu0 0.0
    %971 = vmatpush1.msra.mxu0 0.0
    %972 = vmatprep.subr.mxu0 0.0
    %973 = vmatpush1.msra.mxu0 0.0
    %974 = vmatprep.subr.mxu0 0.0
    %975 = vmatpush1.msra.mxu0 0.0
    %976 = vmatprep.subr.mxu0 0.0
    %977 = vmatpush1.msra.mxu0 0.0
    %978 = vmatprep.subr.mxu0 0.0
    %979 = vmatpush1.msra.mxu0 0.0
    %980 = vmatprep.subr.mxu0 0.0
    %981 = vmatpush1.msra.mxu0 0.0
    %982 = vmatprep.subr.mxu0 0.0
    %983 = vmatpush1.msra.mxu0 0.0
    %984 = vmatprep.subr.mxu0 0.0
    %985 = vmatpush1.msra.mxu0 0.0
    %986 = vmatprep.subr.mxu0 0.0
    %987 = vmatpush1.msra.mxu0 0.0
    %988 = vmatprep.subr.mxu0 0.0
    %989 = vmatpush1.msra.mxu0 0.0
    %990 = vmatprep.subr.mxu0 0.0
    %991 = vmatpush1.msra.mxu0 0.0
    %992 = vmatprep.subr.mxu0 0.0
    %993 = vmatpush1.msra.mxu0 0.0
    %994 = vmatprep.subr.mxu0 0.0
    %995 = vmatpush1.msra.mxu0 0.0
    %996 = vmatprep.subr.mxu0 0.0
    %997 = vmatpush1.msra.mxu0 0.0
    %998 = vmatprep.subr.mxu0 0.0
    %999 = vmatpush1.msra.mxu0 0.0
    %1000 = vmatprep.subr.mxu0 0.0
    %1001 = vmatpush1.msra.mxu0 0.0
    %1002 = vmatprep.subr.mxu0 0.0
    %1003 = vmatpush1.msra.mxu0 0.0
    %1004 = vmatprep.subr.mxu0 0.0
    %1005 = vmatpush1.msra.mxu0 0.0
    %1006 = vmatprep.subr.mxu0 0.0
    %1007 = vmatpush1.msra.mxu0 0.0
    %1008 = vmatprep.subr.mxu0 0.0
    %1009 = vmatpush1.msra.mxu0 0.0
    %1010 = vmatprep.subr.mxu0 0.0
    %1011 = vmatpush1.msra.mxu0 0.0
    %1012 = vmatprep.subr.mxu0 0.0
    %1013 = vmatpush1.msra.mxu0 0.0
    %1014 = vmatprep.subr.mxu0 0.0
    %1015 = vmatpush1.msra.mxu0 0.0
    %1016 = vmatprep.subr.mxu0 0.0
    %1017 = vmatpush1.msra.mxu0 0.0
    %1018 = vmatprep.subr.mxu0 0.0
    %1019 = vmatpush1.msra.mxu0 0.0
    %1020 = vmatprep.subr.mxu0 0.0
    %1021 = vmatpush1.msra.mxu0 0.0
    %1022 = vmatprep.subr.mxu0 0.0
    %1023 = vmatpush1.msra.mxu0 0.0
    %1024 = vmatprep.subr.mxu0 0.0
    %1025 = vmatpush1.msra.mxu0 0.0
    %1026 = vmatprep.mubr.f32.mxu0 0.0
    %1027 = vmatmul.mubr.f32.gmra.mrb[0].mxu0 %v960
    %v1028 = vpop.f32.mrb[0].mxu0
    %v1029 = vadd.f32 %v956, %v1028
    %v1030 = vpop.f32.mrb[0].mxu0
    %1031 = vdwg.mxu0
    %v1032 = vsub.f32 %v870, %v871
    %v1033 = vsub.f32 %v873, %v874
    %v1034 = vsub.f32 %v876, %v877
    %v1035 = vsub.f32 %v879, %v880
    %v1036 = vand.u32 2147483647, %v1032
    %v1037 = vand.u32 2147483647, %v1033
    %v1038 = vand.u32 2147483647, %v1034
    %v1039 = vand.u32 2147483647, %v1035
    %v1041 = vsel %vm180, %v883, 0
    %1043 = vmatprep.subr.mxu0 0.0
    %1044 = vmatpush1.msra.mxu0 %v1036
    %1045 = vmatprep.subr.mxu0 0.0
    %1046 = vmatpush1.msra.mxu0 %v1037
    %1047 = vmatprep.subr.mxu0 0.0
    %1048 = vmatpush1.msra.mxu0 %v1038
    %1049 = vmatprep.subr.mxu0 0.0
    %1050 = vmatpush1.msra.mxu0 %v1039
    %1051 = vmatprep.subr.mxu0 0.0
    %1052 = vmatpush1.msra.mxu0 0.0
    %1053 = vmatprep.subr.mxu0 0.0
    %1054 = vmatpush1.msra.mxu0 0.0
    %1055 = vmatprep.subr.mxu0 0.0
    %1056 = vmatpush1.msra.mxu0 0.0
    %1057 = vmatprep.subr.mxu0 0.0
    %1058 = vmatpush1.msra.mxu0 0.0
    %1059 = vmatprep.subr.mxu0 0.0
    %1060 = vmatpush1.msra.mxu0 0.0
    %1061 = vmatprep.subr.mxu0 0.0
    %1062 = vmatpush1.msra.mxu0 0.0
    %1063 = vmatprep.subr.mxu0 0.0
    %1064 = vmatpush1.msra.mxu0 0.0
    %1065 = vmatprep.subr.mxu0 0.0
    %1066 = vmatpush1.msra.mxu0 0.0
    %1067 = vmatprep.subr.mxu0 0.0
    %1068 = vmatpush1.msra.mxu0 0.0
    %1069 = vmatprep.subr.mxu0 0.0
    %1070 = vmatpush1.msra.mxu0 0.0
    %1071 = vmatprep.subr.mxu0 0.0
    %1072 = vmatpush1.msra.mxu0 0.0
    %1073 = vmatprep.subr.mxu0 0.0
    %1074 = vmatpush1.msra.mxu0 0.0
    %1075 = vmatprep.subr.mxu0 0.0
    %1076 = vmatpush1.msra.mxu0 0.0
    %1077 = vmatprep.subr.mxu0 0.0
    %1078 = vmatpush1.msra.mxu0 0.0
    %1079 = vmatprep.subr.mxu0 0.0
    %1080 = vmatpush1.msra.mxu0 0.0
    %1081 = vmatprep.subr.mxu0 0.0
    %1082 = vmatpush1.msra.mxu0 0.0
    %1083 = vmatprep.subr.mxu0 0.0
    %1084 = vmatpush1.msra.mxu0 0.0
    %1085 = vmatprep.subr.mxu0 0.0
    %1086 = vmatpush1.msra.mxu0 0.0
    %1087 = vmatprep.subr.mxu0 0.0
    %1088 = vmatpush1.msra.mxu0 0.0
    %1089 = vmatprep.subr.mxu0 0.0
    %1090 = vmatpush1.msra.mxu0 0.0
    %1091 = vmatprep.subr.mxu0 0.0
    %1092 = vmatpush1.msra.mxu0 0.0
    %1093 = vmatprep.subr.mxu0 0.0
    %1094 = vmatpush1.msra.mxu0 0.0
    %1095 = vmatprep.subr.mxu0 0.0
    %1096 = vmatpush1.msra.mxu0 0.0
    %1097 = vmatprep.subr.mxu0 0.0
    %1098 = vmatpush1.msra.mxu0 0.0
    %1099 = vmatprep.subr.mxu0 0.0
    %1100 = vmatpush1.msra.mxu0 0.0
    %1101 = vmatprep.subr.mxu0 0.0
    %1102 = vmatpush1.msra.mxu0 0.0
    %1103 = vmatprep.subr.mxu0 0.0
    %1104 = vmatpush1.msra.mxu0 0.0
    %1105 = vmatprep.subr.mxu0 0.0
    %1106 = vmatpush1.msra.mxu0 0.0
    %1107 = vmatprep.mubr.f32.mxu0 0.0
    %1108 = vmatmul.mubr.f32.gmra.mrb[0].mxu0 %v1041
    %v1109 = vpop.f32.mrb[0].mxu0
    %v1110 = vadd.f32 0.0, %v1109
    %v1111 = vpop.f32.mrb[0].mxu0
    %1112 = vdwg.mxu0
    %v1113 = vadd.f32 %v1029, %v1110
    %v1114 = vsub.f32 %v870, %v869
    %v1115 = vsub.f32 %v873, %v872
    %v1116 = vsub.f32 %v876, %v875
    %v1117 = vsub.f32 %v879, %v878
    %v1118 = vand.u32 2147483647, %v1114
    %v1119 = vand.u32 2147483647, %v1115
    %v1120 = vand.u32 2147483647, %v1116
    %v1121 = vand.u32 2147483647, %v1117
    %v1123 = vsel %vm180, %v884, 0
    %1125 = vmatprep.subr.mxu0 0.0
    %1126 = vmatpush1.msra.mxu0 %v1118
    %1127 = vmatprep.subr.mxu0 0.0
    %1128 = vmatpush1.msra.mxu0 %v1119
    %1129 = vmatprep.subr.mxu0 0.0
    %1130 = vmatpush1.msra.mxu0 %v1120
    %1131 = vmatprep.subr.mxu0 0.0
    %1132 = vmatpush1.msra.mxu0 %v1121
    %1133 = vmatprep.subr.mxu0 0.0
    %1134 = vmatpush1.msra.mxu0 0.0
    %1135 = vmatprep.subr.mxu0 0.0
    %1136 = vmatpush1.msra.mxu0 0.0
    %1137 = vmatprep.subr.mxu0 0.0
    %1138 = vmatpush1.msra.mxu0 0.0
    %1139 = vmatprep.subr.mxu0 0.0
    %1140 = vmatpush1.msra.mxu0 0.0
    %1141 = vmatprep.subr.mxu0 0.0
    %1142 = vmatpush1.msra.mxu0 0.0
    %1143 = vmatprep.subr.mxu0 0.0
    %1144 = vmatpush1.msra.mxu0 0.0
    %1145 = vmatprep.subr.mxu0 0.0
    %1146 = vmatpush1.msra.mxu0 0.0
    %1147 = vmatprep.subr.mxu0 0.0
    %1148 = vmatpush1.msra.mxu0 0.0
    %1149 = vmatprep.subr.mxu0 0.0
    %1150 = vmatpush1.msra.mxu0 0.0
    %1151 = vmatprep.subr.mxu0 0.0
    %1152 = vmatpush1.msra.mxu0 0.0
    %1153 = vmatprep.subr.mxu0 0.0
    %1154 = vmatpush1.msra.mxu0 0.0
    %1155 = vmatprep.subr.mxu0 0.0
    %1156 = vmatpush1.msra.mxu0 0.0
    %1157 = vmatprep.subr.mxu0 0.0
    %1158 = vmatpush1.msra.mxu0 0.0
    %1159 = vmatprep.subr.mxu0 0.0
    %1160 = vmatpush1.msra.mxu0 0.0
    %1161 = vmatprep.subr.mxu0 0.0
    %1162 = vmatpush1.msra.mxu0 0.0
    %1163 = vmatprep.subr.mxu0 0.0
    %1164 = vmatpush1.msra.mxu0 0.0
    %1165 = vmatprep.subr.mxu0 0.0
    %1166 = vmatpush1.msra.mxu0 0.0
    %1167 = vmatprep.subr.mxu0 0.0
    %1168 = vmatpush1.msra.mxu0 0.0
    %1169 = vmatprep.subr.mxu0 0.0
    %1170 = vmatpush1.msra.mxu0 0.0
    %1171 = vmatprep.subr.mxu0 0.0
    %1172 = vmatpush1.msra.mxu0 0.0
    %1173 = vmatprep.subr.mxu0 0.0
    %1174 = vmatpush1.msra.mxu0 0.0
    %1175 = vmatprep.subr.mxu0 0.0
    %1176 = vmatpush1.msra.mxu0 0.0
    %1177 = vmatprep.subr.mxu0 0.0
    %1178 = vmatpush1.msra.mxu0 0.0
    %1179 = vmatprep.subr.mxu0 0.0
    %1180 = vmatpush1.msra.mxu0 0.0
    %1181 = vmatprep.subr.mxu0 0.0
    %1182 = vmatpush1.msra.mxu0 0.0
    %1183 = vmatprep.subr.mxu0 0.0
    %1184 = vmatpush1.msra.mxu0 0.0
    %1185 = vmatprep.subr.mxu0 0.0
    %1186 = vmatpush1.msra.mxu0 0.0
    %1187 = vmatprep.subr.mxu0 0.0
    %1188 = vmatpush1.msra.mxu0 0.0
    %1189 = vmatprep.mubr.f32.mxu0 0.0
    %1190 = vmatmul.mubr.f32.gmra.mrb[0].mxu0 %v1123
    %v1191 = vpop.f32.mrb[0].mxu0
    %v1192 = vadd.f32 0.0, %v1191
    %v1193 = vpop.f32.mrb[0].mxu0
    %1194 = vdwg.mxu0
    %v1195 = vadd.f32 %v1113, %v1192
    %v1196 = vsub.f32 %v871, %v869
    %v1197 = vsub.f32 %v874, %v872
    %v1198 = vsub.f32 %v877, %v875
    %v1199 = vsub.f32 %v880, %v878
    %v1200 = vand.u32 2147483647, %v1196
    %v1201 = vand.u32 2147483647, %v1197
    %v1202 = vand.u32 2147483647, %v1198
    %v1203 = vand.u32 2147483647, %v1199
    %v1205 = vsel %vm180, %v885, 0
    %1207 = vmatprep.subr.mxu0 0.0
    %1208 = vmatpush1.msra.mxu0 %v1200
    %1209 = vmatprep.subr.mxu0 0.0
    %1210 = vmatpush1.msra.mxu0 %v1201
    %1211 = vmatprep.subr.mxu0 0.0
    %1212 = vmatpush1.msra.mxu0 %v1202
    %1213 = vmatprep.subr.mxu0 0.0
    %1214 = vmatpush1.msra.mxu0 %v1203
    %1215 = vmatprep.subr.mxu0 0.0
    %1216 = vmatpush1.msra.mxu0 0.0
    %1217 = vmatprep.subr.mxu0 0.0
    %1218 = vmatpush1.msra.mxu0 0.0
    %1219 = vmatprep.subr.mxu0 0.0
    %1220 = vmatpush1.msra.mxu0 0.0
    %1221 = vmatprep.subr.mxu0 0.0
    %1222 = vmatpush1.msra.mxu0 0.0
    %1223 = vmatprep.subr.mxu0 0.0
    %1224 = vmatpush1.msra.mxu0 0.0
    %1225 = vmatprep.subr.mxu0 0.0
    %1226 = vmatpush1.msra.mxu0 0.0
    %1227 = vmatprep.subr.mxu0 0.0
    %1228 = vmatpush1.msra.mxu0 0.0
    %1229 = vmatprep.subr.mxu0 0.0
    %1230 = vmatpush1.msra.mxu0 0.0
    %1231 = vmatprep.subr.mxu0 0.0
    %1232 = vmatpush1.msra.mxu0 0.0
    %1233 = vmatprep.subr.mxu0 0.0
    %1234 = vmatpush1.msra.mxu0 0.0
    %1235 = vmatprep.subr.mxu0 0.0
    %1236 = vmatpush1.msra.mxu0 0.0
    %1237 = vmatprep.subr.mxu0 0.0
    %1238 = vmatpush1.msra.mxu0 0.0
    %1239 = vmatprep.subr.mxu0 0.0
    %1240 = vmatpush1.msra.mxu0 0.0
    %1241 = vmatprep.subr.mxu0 0.0
    %1242 = vmatpush1.msra.mxu0 0.0
    %1243 = vmatprep.subr.mxu0 0.0
    %1244 = vmatpush1.msra.mxu0 0.0
    %1245 = vmatprep.subr.mxu0 0.0
    %1246 = vmatpush1.msra.mxu0 0.0
    %1247 = vmatprep.subr.mxu0 0.0
    %1248 = vmatpush1.msra.mxu0 0.0
    %1249 = vmatprep.subr.mxu0 0.0
    %1250 = vmatpush1.msra.mxu0 0.0
    %1251 = vmatprep.subr.mxu0 0.0
    %1252 = vmatpush1.msra.mxu0 0.0
    %1253 = vmatprep.subr.mxu0 0.0
    %1254 = vmatpush1.msra.mxu0 0.0
    %1255 = vmatprep.subr.mxu0 0.0
    %1256 = vmatpush1.msra.mxu0 0.0
    %1257 = vmatprep.subr.mxu0 0.0
    %1258 = vmatpush1.msra.mxu0 0.0
    %1259 = vmatprep.subr.mxu0 0.0
    %1260 = vmatpush1.msra.mxu0 0.0
    %1261 = vmatprep.subr.mxu0 0.0
    %1262 = vmatpush1.msra.mxu0 0.0
    %1263 = vmatprep.subr.mxu0 0.0
    %1264 = vmatpush1.msra.mxu0 0.0
    %1265 = vmatprep.subr.mxu0 0.0
    %1266 = vmatpush1.msra.mxu0 0.0
    %1267 = vmatprep.subr.mxu0 0.0
    %1268 = vmatpush1.msra.mxu0 0.0
    %1269 = vmatprep.subr.mxu0 0.0
    %1270 = vmatpush1.msra.mxu0 0.0
    %1271 = vmatprep.mubr.f32.mxu0 0.0
    %1272 = vmatmul.mubr.f32.gmra.mrb[0].mxu0 %v1205
    %v1273 = vpop.f32.mrb[0].mxu0
    %v1274 = vadd.f32 0.0, %v1273
    %v1275 = vpop.f32.mrb[0].mxu0
    %1276 = vdwg.mxu0
    %v1277 = vadd.f32 %v1195, %v1274
    %s1278 = sld [smem:[#allocation2]]
    %v1279 = vstv %s1278
    %v1280 = vadd.f32 %v1277, %v1279
    %v1281 = vmax.f32 %v1280, 0.0
    %1282 = vst [vmem:[#allocation3] sm:$0x1] %v1281
    // Predicated region
    $region30: #{tpu_custom_call.1} parent=1 // pred_check
      _
    $region31: #{tpu_custom_call.1} parent=1 // pred_check_branch
      %1284 = sbr.rel (0) target = $region33
    $region32: #{tpu_custom_call.1} parent=1 // pred_region
      %s1286 = ssub.s32 16, 16
      %1287 = vsyncadd [#allocation4], %s1286
      %s1289 = sshll.u32 [#allocation3], 4
      %s1290 = int_to_ptr.vmem [resolvable:$true] %s1289
      %1292 = dma.vmem_to_hbm [thread:$0]  %s1290, 16, %s7, [#allocation4]
    $region33: #{tpu_custom_call.1} parent=1 // pred_fallthru
      _
    // Predicated region
    $region34: #{tpu_custom_call.1} parent=1 // pred_check
      _
    $region35: #{tpu_custom_call.1} parent=1 // pred_check_branch
      %1294 = sbr.rel (0) target = $region37
    $region36: #{tpu_custom_call.1} parent=1 // pred_region
      %1295 = dma.done [#allocation4], 16
    $region37: #{tpu_custom_call.1} parent=1 // pred_fallthru
      _
    %1296 = vsyncpa [#allocation4], 1

</llo_original>
